<compile_context>
chip_gen: v6e
topology: v6e:2x2x1
jax: 0.10.0
libtpu: 0.0.40
codegen_flags: <defaults>
</compile_context>

<pallas_src>
import jax
import jax.numpy as jnp
from jax.experimental import pallas as pl
from jax.experimental.pallas import tpu as pltpu

EPS = 1e-5
_VMEM_LIMIT_BYTES = 48 * 1024 * 1024  # safe on v5e/v6e (128 MiB phys) and v7x (64 MiB phys)


def _cond_ln_kernel(x_ref, gamma_ref, beta_ref, o_ref):
    # x_ref:     (BB, TS, H)  rows of BB batch elements
    # gamma_ref: (BB, 1, H)   per-batch conditioned scale (gamma + b_g + cond @ W_g^T)
    # beta_ref:  (BB, 1, H)   per-batch conditioned shift (beta  + b_b + cond @ W_b^T)
    x = x_ref[...].astype(jnp.float32)                     # (BB, TS, H)

    # LayerNorm over the feature (lane) axis; biased variance (torch unbiased=False).
    mean = jnp.mean(x, axis=-1, keepdims=True)             # (BB, TS, 1)
    xc = x - mean
    var = jnp.mean(xc * xc, axis=-1, keepdims=True)        # (BB, TS, 1)
    x_norm = xc * jax.lax.rsqrt(var + EPS)                 # (BB, TS, H)

    # (BB, 1, H) conditioned affine broadcasts over the TS rows of each batch.
    o_ref[...] = (gamma_ref[...] * x_norm + beta_ref[...]).astype(o_ref.dtype)


def _pick_blocks(B, S, H, dtype):
    """Pick (BB, TS): batch/sequence block sizes for (BB, TS, H) tiles."""
    itemsize = jnp.dtype(dtype).itemsize
    pack = 8 * max(1, 4 // itemsize)          # sublane pack: f32->8, bf16->16, int8/fp8->32
    # Per-tile byte target in the I/O dtype.  Conservative enough that the
    # double-buffered input + output tiles plus in-kernel f32 temporaries fit
    # inside the 48 MiB scoped-VMEM limit on every generation (incl. v7x).
    target_bytes = (4 << 20) if itemsize >= 4 else (2 << 20)
    row_bytes = max(1, H * itemsize)
    target_rows = max(pack, (target_bytes // row_bytes) // pack * pack)

    if S > target_rows:
        TS, BB = target_rows, 1               # tile the sequence axis
    else:
        TS = S                                # full extent: always a legal block dim
        BB = max(1, min(B, target_rows // max(1, S)))

    # v7x has 2 TensorCores sharding the "parallel" axes: make sure there are
    # at least 2 grid steps whenever the problem can be split.
    if pl.cdiv(B, BB) * pl.cdiv(S, TS) < 2:
        if B >= 2:
            BB = -(-B // 2)                   # ceil(B / 2) -> 2 batch blocks
        elif S >= 2 * pack:
            TS = max(pack, ((S // 2) // pack) * pack)
    return BB, TS


def prepare_cond_ln_params(gamma, beta, wg_t, bg, wb_t, bb):
    """One-time parameter prep (hoisted out of the per-call path):
    fused projection weight (C, 2H) and folded constant offsets (2H,)."""
    w_cat = jnp.concatenate([wg_t, wb_t], axis=1)                  # (C, 2H)
    base = jnp.concatenate([gamma + bg, beta + bb], axis=0)        # (2H,)
    return w_cat, base


def conditional_layer_norm(x, conditioning, w_cat, base):
    """
    x:            [B, ..., H]   (any number of middle dims, like the module)
    conditioning: [B, C]
    w_cat:        [C, 2H]   concat of the two nn.Linear weights (transposed)
    base:         [2H]      (gamma + b_g) ++ (beta + b_b)
    """
    orig_shape = x.shape
    B, H = orig_shape[0], orig_shape[-1]
    x3 = x.reshape(B, -1, H)
    S = x3.shape[1]

    # Hoisted conditioning projection: one fused (B,C) @ (C,2H) MXU matmul.
    proj = jnp.dot(conditioning.astype(jnp.float32), w_cat.astype(jnp.float32),
                   preferred_element_type=jnp.float32) + base.astype(jnp.float32)
    gamma_cond = proj[:, :H].reshape(B, 1, H)                       # (B, 1, H)
    beta_cond = proj[:, H:].reshape(B, 1, H)                        # (B, 1, H)

    BB, TS = _pick_blocks(B, S, H, x.dtype)
    grid = (pl.cdiv(B, BB), pl.cdiv(S, TS))

    # NOTE: H stays a full-extent last block dim.  For H not a multiple of 128
    # (e.g. the tiny demo H=32) output stores are masked, but padding H in HBM
    # would multiply the traffic of this bandwidth-bound kernel, so we don't.
    out = pl.pallas_call(
        _cond_ln_kernel,
        out_shape=jax.ShapeDtypeStruct((B, S, H), x.dtype),
        grid_spec=pltpu.PrefetchScalarGridSpec(
            num_scalar_prefetch=0,
            grid=grid,
            in_specs=[
                pl.BlockSpec((BB, TS, H), lambda b, s: (b, s, 0)),   # x
                pl.BlockSpec((BB, 1, H), lambda b, s: (b, 0, 0)),    # gamma_cond
                pl.BlockSpec((BB, 1, H), lambda b, s: (b, 0, 0)),    # beta_cond
            ],
            out_specs=pl.BlockSpec((BB, TS, H), lambda b, s: (b, s, 0)),
        ),
        compiler_params=pltpu.CompilerParams(
            dimension_semantics=("parallel", "parallel"),
            vmem_limit_bytes=_VMEM_LIMIT_BYTES,
        ),
    )(x3, gamma_cond, beta_cond)
    return out.reshape(orig_shape)


def _reference(x, conditioning, gamma, beta, wg_t, bg, wb_t, bb):
    mean = jnp.mean(x, axis=-1, keepdims=True)
    var = jnp.mean((x - mean) ** 2, axis=-1, keepdims=True)
    x_norm = (x - mean) / jnp.sqrt(var + EPS)
    gamma_cond = gamma + conditioning @ wg_t + bg          # (B, H)
    beta_cond = beta + conditioning @ wb_t + bb            # (B, H)
    return gamma_cond[:, None, :] * x_norm + beta_cond[:, None, :]


if __name__ == "__main__":
    # Small shapes consistent with the module's forward:
    #   x: [batch, seq, normalized_shape], conditioning: [batch, conditioning_dim]
    B, S, H, C = 2, 8, 32, 16

    key = jax.random.PRNGKey(0)
    kx, kc, kwg, kbg, kwb, kbb = jax.random.split(key, 6)

    x = jax.random.normal(kx, (B, S, H), dtype=jnp.float32)
    conditioning = jax.random.normal(kc, (B, C), dtype=jnp.float32)

    # Parameters (matching the module's shapes):
    gamma = jnp.ones((H,), dtype=jnp.float32)               # nn.Parameter(ones)
    beta = jnp.zeros((H,), dtype=jnp.float32)                # nn.Parameter(zeros)
    # nn.Linear(C, H): weight [H, C], bias [H]; we store the transpose [C, H].
    wg_t = 0.05 * jax.random.normal(kwg, (C, H), dtype=jnp.float32)
    bg = 0.05 * jax.random.normal(kbg, (H,), dtype=jnp.float32)
    wb_t = 0.05 * jax.random.normal(kwb, (C, H), dtype=jnp.float32)
    bb = 0.05 * jax.random.normal(kbb, (H,), dtype=jnp.float32)

    # One-time parameter prep (hoisted concat + bias folding).
    w_cat, base = prepare_cond_ln_params(gamma, beta, wg_t, bg, wb_t, bb)

    out = conditional_layer_norm(x, conditioning, w_cat, base)
    out = jax.block_until_ready(out)

    ref = _reference(x, conditioning, gamma, beta, wg_t, bg, wb_t, bb)
    assert out.shape == (B, S, H)
    assert jnp.allclose(out, ref, atol=1e-4, rtol=1e-4)

    print("KERNEL_OK")
</pallas_src>

<mosaic_0001>
module attributes {stable_mosaic.version = 11 : i64} {
  func.func @_cond_ln_kernel(%arg0: i32, %arg1: i32, %arg2: memref<1x8x32xf32, #tpu.memory_space<vmem>>, %arg3: memref<1x1x32xf32, #tpu.memory_space<vmem>>, %arg4: memref<1x1x32xf32, #tpu.memory_space<vmem>>, %arg5: memref<1x8x32xf32, #tpu.memory_space<vmem>>) attributes {dimension_semantics = [#tpu.dimension_semantics<parallel>, #tpu.dimension_semantics<parallel>], iteration_bounds = array<i64: 2, 1>, scalar_prefetch = 0 : i64, scratch_operands = 0 : i64, tpu.core_type = #tpu.core_type<tc>, window_params = [{transform_indices = @transform_0, window_bounds = array<i64: 1, 8, 32>}, {transform_indices = @transform_1, window_bounds = array<i64: 1, 1, 32>}, {transform_indices = @transform_2, window_bounds = array<i64: 1, 1, 32>}, {transform_indices = @transform_3, window_bounds = array<i64: 1, 8, 32>}]} {
    %c0 = arith.constant 0 : index
    %c0_0 = arith.constant 0 : index
    %c0_1 = arith.constant 0 : index
    %0 = vector.load %arg2[%c0, %c0_0, %c0_1] : memref<1x8x32xf32, #tpu.memory_space<vmem>>, vector<1x8x32xf32>
    %cst = arith.constant dense<0.000000e+00> : vector<1x8xf32>
    %1 = vector.multi_reduction <add>, %0, %cst [2] : vector<1x8x32xf32> to vector<1x8xf32>
    %2 = vector.shape_cast %1 : vector<1x8xf32> to vector<1x8x1xf32>
    %cst_2 = arith.constant 3.200000e+01 : f32
    %3 = vector.broadcast %cst_2 : f32 to vector<1x8x1xf32>
    %4 = arith.divf %2, %3 : vector<1x8x1xf32>
    %5 = vector.broadcast %4 : vector<1x8x1xf32> to vector<1x8x32xf32>
    %6 = arith.subf %0, %5 : vector<1x8x32xf32>
    %7 = arith.mulf %6, %6 : vector<1x8x32xf32>
    %cst_3 = arith.constant dense<0.000000e+00> : vector<1x8xf32>
    %8 = vector.multi_reduction <add>, %7, %cst_3 [2] : vector<1x8x32xf32> to vector<1x8xf32>
    %9 = vector.shape_cast %8 : vector<1x8xf32> to vector<1x8x1xf32>
    %cst_4 = arith.constant 3.200000e+01 : f32
    %10 = vector.broadcast %cst_4 : f32 to vector<1x8x1xf32>
    %11 = arith.divf %9, %10 : vector<1x8x1xf32>
    %cst_5 = arith.constant 9.99999974E-6 : f32
    %12 = vector.broadcast %cst_5 : f32 to vector<1x8x1xf32>
    %13 = arith.addf %11, %12 : vector<1x8x1xf32>
    %14 = math.rsqrt %13 : vector<1x8x1xf32>
    %15 = vector.broadcast %14 : vector<1x8x1xf32> to vector<1x8x32xf32>
    %16 = arith.mulf %6, %15 : vector<1x8x32xf32>
    %c0_6 = arith.constant 0 : index
    %c0_7 = arith.constant 0 : index
    %c0_8 = arith.constant 0 : index
    %17 = vector.load %arg3[%c0_6, %c0_7, %c0_8] : memref<1x1x32xf32, #tpu.memory_space<vmem>>, vector<1x1x32xf32>
    %18 = vector.broadcast %17 : vector<1x1x32xf32> to vector<1x8x32xf32>
    %19 = arith.mulf %18, %16 : vector<1x8x32xf32>
    %c0_9 = arith.constant 0 : index
    %c0_10 = arith.constant 0 : index
    %c0_11 = arith.constant 0 : index
    %20 = vector.load %arg4[%c0_9, %c0_10, %c0_11] : memref<1x1x32xf32, #tpu.memory_space<vmem>>, vector<1x1x32xf32>
    %21 = vector.broadcast %20 : vector<1x1x32xf32> to vector<1x8x32xf32>
    %22 = arith.addf %19, %21 : vector<1x8x32xf32>
    %c0_12 = arith.constant 0 : index
    %c0_13 = arith.constant 0 : index
    %c0_14 = arith.constant 0 : index
    %23 = vector.load %arg5[%c0_12, %c0_13, %c0_14] : memref<1x8x32xf32, #tpu.memory_space<vmem>>, vector<1x8x32xf32>
    tpu.vector_store %arg5[%c0_12, %c0_13, %c0_14], %22 {strides = array<i32>} : memref<1x8x32xf32, #tpu.memory_space<vmem>>, vector<1x8x32xf32>,
    return
  }
  func.func @transform_0(%arg0: i32, %arg1: i32) -> (i32, i32, i32) {
    %c0_i32 = arith.constant 0 : i32
    %c0_i32_0 = arith.constant 0 : i32
    return %arg0, %arg1, %c0_i32 : i32, i32, i32
  }
  func.func @transform_1(%arg0: i32, %arg1: i32) -> (i32, i32, i32) {
    %c0_i32 = arith.constant 0 : i32
    %c0_i32_0 = arith.constant 0 : i32
    %c0_i32_1 = arith.constant 0 : i32
    return %arg0, %c0_i32, %c0_i32_0 : i32, i32, i32
  }
  func.func @transform_2(%arg0: i32, %arg1: i32) -> (i32, i32, i32) {
    %c0_i32 = arith.constant 0 : i32
    %c0_i32_0 = arith.constant 0 : i32
    %c0_i32_1 = arith.constant 0 : i32
    return %arg0, %c0_i32, %c0_i32_0 : i32, i32, i32
  }
  func.func @transform_3(%arg0: i32, %arg1: i32) -> (i32, i32, i32) {
    %c0_i32 = arith.constant 0 : i32
    %c0_i32_0 = arith.constant 0 : i32
    return %arg0, %arg1, %c0_i32 : i32, i32, i32
  }
}

</mosaic_0001>

<llo_original>
// kernel: tpu_custom_call.1
$region0: #{tpu_custom_call.1}
  #allocation0 [shape = 'u32[]', space=smem, size = 0x4, offset = 0x4, fixed_abs, tag = 'smem constant byte address 0x4 - core index']
  #allocation1 [shape = 'u32[144,128]{1,0:T(1,128)}', space=vmem, size = 0x12000, scoped, tag = 'internal scratch']
  %s0 = inlined_call_operand.hbm [shape: f32[2,8,32], index: 0, kind: input, shape index: {}]
  %s1 = inlined_call_operand.hbm [shape: f32[2,1,32], index: 1, kind: input, shape index: {}]
  %s2 = inlined_call_operand.vmem [shape: f32[2,1,32], index: 2, kind: input, shape index: {}]
  %s3 = inlined_call_operand.hbm [shape: f32[2,8,32], index: 3, kind: output, shape index: {}]
  %s4 = sld [smem:[#allocation0]]
  $region53: #{tpu_custom_call.1} parent=0
    _
  %s6 = ssub.s32 1, %s4
  %s7 = scalar_select 0, %s6, %s4
  $region1: #{tpu_custom_call.1} parent=0
    #allocation2 [shape = 'u8[8192]{0}', space=vmem, size = 0x2000, scoped, tag = 'input window, operand 0']
    #allocation3 [shape = 's32[2]{0}', space=sflag, size = 0x8, scoped, tag = 'scoped memory for tpu_custom_call.1']
    #allocation4 [shape = 's32[2]{0}', space=sflag, size = 0x8, scoped, tag = 'scoped memory for tpu_custom_call.1']
    #allocation5 [shape = 'u8[1024]{0}', space=vmem, size = 0x400, scoped, tag = 'input window, operand 1']
    #allocation6 [shape = 's32[2]{0}', space=sflag, size = 0x8, scoped, tag = 'scoped memory for tpu_custom_call.1']
    #allocation7 [shape = 'u8[8192]{0}', space=vmem, size = 0x2000, scoped, tag = 'output window, operand 0']
    %8 = vsyncpa [#allocation3], 0
    %s9 = scalar_lea.sflag [#allocation3], 1
    %10 = vsyncpa %s9, 0
    %11 = vsyncpa [#allocation6], 0
    %s12 = scalar_lea.sflag [#allocation6], 1
    %13 = vsyncpa %s12, 0
    %14 = vsyncpa [#allocation4], 0
    %s15 = scalar_lea.sflag [#allocation4], 1
    %16 = vsyncpa %s15, 0
    loop: start=0, step=1, limit=4
    $region2: #{tpu_custom_call.1} parent=1 // loop_pre_header
      _
    $region3: #{tpu_custom_call.1} parent=1 // loop_header
      %s18 = sphi 0, %s22
      %p19 = scmp.ge.s32.totalorder %s18, 4
      %s25 = sphi 0, %s37
      %s26 = sphi 0, %s33
      %s27 = sphi 0, %s25
      %s28 = sphi 0, %s26
      %s29 = sphi 0, %s27
      %s30 = sphi 0, %s28
      %s42 = sphi 0, %s44
      %s45 = sphi 0, %s42
      %s46 = sphi 0, %s45
      %s62 = sphi 0, %s46
      %s68 = sphi 0, %s70
      %s71 = sphi 0, %s68
      %s72 = sphi 0, %s71
      %s88 = sphi 0, %s72
      %s94 = sphi 0, %s96
      %s97 = sphi 0, %s94
      %s98 = sphi 0, %s97
      %s114 = sphi 0, %s98
      %s122 = sphi 0, %s124
      %s125 = sphi 0, %s122
      %s126 = sphi 0, %s125
      %s142 = sphi 0, %s126
    $region4: #{tpu_custom_call.1} parent=1 // loop_header_branch
      %21 = sbr.rel (%p19) target = $region8
    $region5: #{tpu_custom_call.1} parent=1 // loop_body
      %s23 = ssub.s32 %s18, 1
      %s24 = ssub.s32 %s18, 2
      %s31 = sadd.s32 1, %s26
      %p32 = scmp.ge.s32.totalorder %s31, 1
      %s33 = scalar_select %p32, 0, %s31
      %s34 = sadd.s32 1, %s25
      %s35 = scalar_select %p32, %s34, %s25
      %p36 = scmp.ge.s32.totalorder %s35, 2
      %s37 = scalar_select %p36, 0, %s35
      %s38 = ssub.s32 %s25, %s37
      %s39 = ssub.s32 %s26, %s33
      %s40 = sor.u32 %s38, %s39
      %p41 = scmp.eq.s32.totalorder %s40, 0
      %s43 = sadd.s32 %s42, 1
      %s44 = scalar_select %p41, %s42, %s43
      %p47 = pneg %p41
      %p48 = scmp.eq.s32.totalorder %s18, 1
      %p49 = por %p47, %p48
      %p50 = scmp.ne.s32.totalorder %s42, %s45
      %p51 = scmp.eq.s32.totalorder %s18, 0
      %p52 = por %p50, %p51
      %p53 = scmp.ne.s32.totalorder %s42, %s45
      %p54 = scmp.eq.s32.totalorder %s23, 1
      %p55 = por %p53, %p54
      %p56 = scmp.ne.s32.totalorder %s45, %s46
      %p57 = scmp.eq.s32.totalorder %s23, 0
      %p58 = por %p56, %p57
      %p59 = scmp.ne.s32.totalorder %s45, %s46
      %p60 = scmp.eq.s32.totalorder %s24, 1
      %p61 = por %p59, %p60
      %p63 = scmp.ne.s32.totalorder %s46, %s62
      %p64 = scmp.eq.s32.totalorder %s24, 0
      %p65 = por %p63, %p64
      %s66 = ssub.s32 %s25, %s37
      %p67 = scmp.eq.s32.totalorder %s66, 0
      %s69 = sadd.s32 %s68, 1
      %s70 = scalar_select %p67, %s68, %s69
      %p73 = pneg %p67
      %p74 = scmp.eq.s32.totalorder %s18, 1
      %p75 = por %p73, %p74
      %p76 = scmp.ne.s32.totalorder %s68, %s71
      %p77 = scmp.eq.s32.totalorder %s18, 0
      %p78 = por %p76, %p77
      %p79 = scmp.ne.s32.totalorder %s68, %s71
      %p80 = scmp.eq.s32.totalorder %s23, 1
      %p81 = por %p79, %p80
      %p82 = scmp.ne.s32.totalorder %s71, %s72
      %p83 = scmp.eq.s32.totalorder %s23, 0
      %p84 = por %p82, %p83
      %p85 = scmp.ne.s32.totalorder %s71, %s72
      %p86 = scmp.eq.s32.totalorder %s24, 1
      %p87 = por %p85, %p86
      %p89 = scmp.ne.s32.totalorder %s72, %s88
      %p90 = scmp.eq.s32.totalorder %s24, 0
      %p91 = por %p89, %p90
      %s92 = ssub.s32 %s25, %s37
      %p93 = scmp.eq.s32.totalorder %s92, 0
      %s95 = sadd.s32 %s94, 1
      %s96 = scalar_select %p93, %s94, %s95
      %p99 = pneg %p93
      %p100 = scmp.eq.s32.totalorder %s18, 1
      %p101 = por %p99, %p100
      %p102 = scmp.ne.s32.totalorder %s94, %s97
      %p103 = scmp.eq.s32.totalorder %s18, 0
      %p104 = por %p102, %p103
      %p105 = scmp.ne.s32.totalorder %s94, %s97
      %p106 = scmp.eq.s32.totalorder %s23, 1
      %p107 = por %p105, %p106
      %p108 = scmp.ne.s32.totalorder %s97, %s98
      %p109 = scmp.eq.s32.totalorder %s23, 0
      %p110 = por %p108, %p109
      %p111 = scmp.ne.s32.totalorder %s97, %s98
      %p112 = scmp.eq.s32.totalorder %s24, 1
      %p113 = por %p111, %p112
      %p115 = scmp.ne.s32.totalorder %s98, %s114
      %p116 = scmp.eq.s32.totalorder %s24, 0
      %p117 = por %p115, %p116
      %s118 = ssub.s32 %s25, %s37
      %s119 = ssub.s32 %s26, %s33
      %s120 = sor.u32 %s118, %s119
      %p121 = scmp.eq.s32.totalorder %s120, 0
      %s123 = sadd.s32 %s122, 1
      %s124 = scalar_select %p121, %s122, %s123
      %p127 = pneg %p121
      %p128 = scmp.eq.s32.totalorder %s18, 1
      %p129 = por %p127, %p128
      %p130 = scmp.ne.s32.totalorder %s122, %s125
      %p131 = scmp.eq.s32.totalorder %s18, 0
      %p132 = por %p130, %p131
      %p133 = scmp.ne.s32.totalorder %s122, %s125
      %p134 = scmp.eq.s32.totalorder %s23, 1
      %p135 = por %p133, %p134
      %p136 = scmp.ne.s32.totalorder %s125, %s126
      %p137 = scmp.eq.s32.totalorder %s23, 0
      %p138 = por %p136, %p137
      %p139 = scmp.ne.s32.totalorder %s125, %s126
      %p140 = scmp.eq.s32.totalorder %s24, 1
      %p141 = por %p139, %p140
      %p143 = scmp.ne.s32.totalorder %s126, %s142
      %p144 = scmp.eq.s32.totalorder %s24, 0
      %p145 = por %p143, %p144
      %p146 = scmp.le.s32.totalorder 1, %s18
      %p147 = scmp.lt.s32.totalorder %s18, 3
      %p148 = pnand %p146, %p147
      %p149 = pneg %p148
      // Predicated region
      $region9: #{tpu_custom_call.1} parent=5 // pred_check
        _
      $region10: #{tpu_custom_call.1} parent=5 // pred_check_branch
        %151 = sbr.rel (%p148) target = $region12
      $region11: #{tpu_custom_call.1} parent=5 // pred_region
        %s152 = ssub.s32 %s18, 1
      $region12: #{tpu_custom_call.1} parent=5 // pred_fallthru
        _
      %p153 = scmp.lt.s32.totalorder %s18, 2
      // Predicated region
      $region13: #{tpu_custom_call.1} parent=5 // pred_check
        %p154 = pneg %p153
      $region14: #{tpu_custom_call.1} parent=5 // pred_check_branch
        %156 = sbr.rel (%p154) target = $region16
      $region15: #{tpu_custom_call.1} parent=5 // pred_region
        // Predicated region
        $region17: #{tpu_custom_call.1} parent=15 // pred_check
          %p157 = pneg %p52
        $region18: #{tpu_custom_call.1} parent=15 // pred_check_branch
          %159 = sbr.rel (%p157) target = $region20
        $region19: #{tpu_custom_call.1} parent=15 // pred_region
          %s160 = sand.u32 %s42, 1
          %s161 = scalar_lea.sflag [#allocation3], %s160
          %s162 = sand.u32 %s42, 1
          %s163 = smul.addr %s162, 8
          %s164 = scalar_lea.vmem [#allocation2], %s163
          %s166 = ssub.s32 128, 128
          %167 = vsyncadd %s161, %s166
          %s168 = sadd.s32 %s26, %s25
          %s169 = smul.addr %s168, 128
          %s170 = scalar_lea.hbm %s0, %s169
          %s172 = sshll.u32 %s164, 4
          %s173 = int_to_ptr.vmem [resolvable:$true] %s172
          %175 = dma.hbm_to_vmem [thread:$0]  %s170, 128, %s173, %s161
        $region20: #{tpu_custom_call.1} parent=15 // pred_fallthru
          _
        // Predicated region
        $region21: #{tpu_custom_call.1} parent=15 // pred_check
          %p176 = pneg %p78
        $region22: #{tpu_custom_call.1} parent=15 // pred_check_branch
          %178 = sbr.rel (%p176) target = $region24
        $region23: #{tpu_custom_call.1} parent=15 // pred_region
          %s179 = sand.u32 %s68, 1
          %s180 = scalar_lea.sflag [#allocation6], %s179
          %s181 = sand.u32 %s68, 1
          %s182 = scalar_lea.vmem [#allocation5], %s181
          %s184 = ssub.s32 16, 16
          %185 = vsyncadd %s180, %s184
          %s186 = smul.addr %s25, 16
          %s187 = scalar_lea.hbm %s1, %s186
          %s189 = sshll.u32 %s182, 4
          %s190 = int_to_ptr.vmem [resolvable:$true] %s189
          %192 = dma.hbm_to_vmem [thread:$0]  %s187, 16, %s190, %s180
        $region24: #{tpu_custom_call.1} parent=15 // pred_fallthru
          _
        // Predicated region
        $region25: #{tpu_custom_call.1} parent=15 // pred_check
          %p193 = pneg %p104
        $region26: #{tpu_custom_call.1} parent=15 // pred_check_branch
          %195 = sbr.rel (%p193) target = $region28
        $region27: #{tpu_custom_call.1} parent=15 // pred_region
          %p196 = scmp.lt.s32.totalorder %s25, 1
          %s197 = scalar_select %p196, %s25, 1
          %s198 = scalar_lea.vmem %s2, %s197
        $region28: #{tpu_custom_call.1} parent=15 // pred_fallthru
          _
      $region16: #{tpu_custom_call.1} parent=5 // pred_fallthru
        _
      %p199 = scmp.le.s32.totalorder 1, %s18
      %p200 = scmp.lt.s32.totalorder %s18, 3
      %p201 = pnand %p199, %p200
      %p202 = pneg %p201
      // Predicated region
      $region29: #{tpu_custom_call.1} parent=5 // pred_check
        _
      $region30: #{tpu_custom_call.1} parent=5 // pred_check_branch
        %204 = sbr.rel (%p201) target = $region32
      $region31: #{tpu_custom_call.1} parent=5 // pred_region
        %s205 = ssub.s32 %s18, 1
        %s206 = sand.u32 %s45, 1
        %s207 = scalar_lea.sflag [#allocation3], %s206
        %s208 = sand.u32 %s45, 1
        %s209 = smul.addr %s208, 8
        %s210 = scalar_lea.vmem [#allocation2], %s209
        // Predicated region
        $region33: #{tpu_custom_call.1} parent=31 // pred_check
          %p211 = pneg %p58
        $region34: #{tpu_custom_call.1} parent=31 // pred_check_branch
          %213 = sbr.rel (%p211) target = $region36
        $region35: #{tpu_custom_call.1} parent=31 // pred_region
          %214 = dma.done %s207, 128
        $region36: #{tpu_custom_call.1} parent=31 // pred_fallthru
          _
        %s215 = sand.u32 %s71, 1
        %s216 = scalar_lea.sflag [#allocation6], %s215
        %s217 = sand.u32 %s71, 1
        %s218 = scalar_lea.vmem [#allocation5], %s217
        // Predicated region
        $region37: #{tpu_custom_call.1} parent=31 // pred_check
          %p219 = pneg %p84
        $region38: #{tpu_custom_call.1} parent=31 // pred_check_branch
          %221 = sbr.rel (%p219) target = $region40
        $region39: #{tpu_custom_call.1} parent=31 // pred_region
          %222 = dma.done %s216, 16
        $region40: #{tpu_custom_call.1} parent=31 // pred_fallthru
          _
        %s223 = sand.u32 %s45, 1
        %s224 = scalar_lea.sflag [#allocation3], %s223
        %s225 = sand.u32 %s45, 1
        %s226 = smul.addr %s225, 8
        %s227 = scalar_lea.vmem [#allocation2], %s226
        %p228 = pneg %p58
        %p229 = pneg %p55
        %s230 = sand.u32 %s71, 1
        %s231 = scalar_lea.sflag [#allocation6], %s230
        %s232 = sand.u32 %s71, 1
        %s233 = scalar_lea.vmem [#allocation5], %s232
        %p234 = pneg %p84
        %p235 = pneg %p81
        %p236 = scmp.lt.s32.totalorder %s27, 1
        %s237 = scalar_select %p236, %s27, 1
        %s238 = scalar_lea.vmem %s2, %s237
        %p239 = pneg %p110
        %p240 = pneg %p107
        %p241 = pneg %p138
        %p242 = pneg %p135
        %s243 = sand.u32 %s125, 1
        %s244 = scalar_lea.sflag [#allocation4], %s243
        %s245 = sand.u32 %s125, 1
        %s246 = smul.addr %s245, 8
        %s247 = scalar_lea.vmem [#allocation7], %s246
        %p248 = scmp.lt.s32.totalorder %s27, 1
        %s249 = scalar_select %p248, %s27, 1
        %s250 = scalar_lea.vmem %s2, %s249
        %v251 = vld [vmem:[%s210] sm:$0xff]
        %vm252 = vcmask 261120
        %v253 = vsel %vm252, %v251, 0.0
        %254 = vadd.xlane.f32.xlu0 %v253
        %v255 = vpop.xlane.xlu0 %254
        %v256 = vrcp.pop 32.0
        %v257 = vmul.f32 %v255, %v256
        %v258 = vsub.f32 %v251, %v257
        %v259 = vmul.f32 %v258, %v258
        %v260 = vsel %vm252, %v259, 0.0
        %261 = vadd.xlane.f32.xlu0 %v260
        %v262 = vpop.xlane.xlu0 %261
        %v263 = vmul.f32 %v262, %v256
        %v264 = vadd.f32 %v263, 1e-05
        %v265 = vrsqrt.pop %v264
        %v266 = vmul.f32 %v258, %v265
        %v267 = vld [vmem:[%s218] sm:$0x1]
        %v269 = vlaneseq
        %v270 = vshrl.u32 %v269, 7
        %v271 = vsub.s32 0, %v270
        %v272 = vrot.slane %v267, %v271
        %v274 = vmul.f32 %v272, %v266
        %v275 = vld [vmem:[%s250] sm:$0x1]
        %v277 = vlaneseq
        %v278 = vshrl.u32 %v277, 7
        %v279 = vsub.s32 0, %v278
        %v280 = vrot.slane %v275, %v279
        %v282 = vadd.f32 %v274, %v280
        %283 = vst.msk [vmem:[%s247] sm:$0xff] %vm252, %v282
        %s284 = sand.u32 %s125, 1
        %s285 = scalar_lea.sflag [#allocation4], %s284
        %s286 = sand.u32 %s125, 1
        %s287 = smul.addr %s286, 8
        %s288 = scalar_lea.vmem [#allocation7], %s287
        // Predicated region
        $region41: #{tpu_custom_call.1} parent=31 // pred_check
          %p289 = pneg %p135
        $region42: #{tpu_custom_call.1} parent=31 // pred_check_branch
          %291 = sbr.rel (%p289) target = $region44
        $region43: #{tpu_custom_call.1} parent=31 // pred_region
          %s293 = ssub.s32 128, 128
          %294 = vsyncadd %s285, %s293
          %s295 = sadd.s32 %s28, %s27
          %s296 = smul.addr %s295, 128
          %s297 = scalar_lea.hbm %s3, %s296
          %s299 = sshll.u32 %s288, 4
          %s300 = int_to_ptr.vmem [resolvable:$true] %s299
          %302 = dma.vmem_to_hbm [thread:$0]  %s300, 128, %s297, %s285
        $region44: #{tpu_custom_call.1} parent=31 // pred_fallthru
          _
      $region32: #{tpu_custom_call.1} parent=5 // pred_fallthru
        _
      %p303 = scmp.le.s32.totalorder 2, %s18
      // Predicated region
      $region45: #{tpu_custom_call.1} parent=5 // pred_check
        %p304 = pneg %p303
      $region46: #{tpu_custom_call.1} parent=5 // pred_check_branch
        %306 = sbr.rel (%p304) target = $region48
      $region47: #{tpu_custom_call.1} parent=5 // pred_region
        %s307 = ssub.s32 %s18, 2
        // Predicated region
        $region49: #{tpu_custom_call.1} parent=47 // pred_check
          %p308 = pneg %p141
        $region50: #{tpu_custom_call.1} parent=47 // pred_check_branch
          %310 = sbr.rel (%p308) target = $region52
        $region51: #{tpu_custom_call.1} parent=47 // pred_region
          %s311 = sand.u32 %s126, 1
          %s312 = scalar_lea.sflag [#allocation4], %s311
          %s313 = sand.u32 %s126, 1
          %s314 = smul.addr %s313, 8
          %s315 = scalar_lea.vmem [#allocation7], %s314
          %316 = dma.done %s312, 128
        $region52: #{tpu_custom_call.1} parent=47 // pred_fallthru
          _
      $region48: #{tpu_custom_call.1} parent=5 // pred_fallthru
        _
    $region6: #{tpu_custom_call.1} parent=1 // loop_footer
      %s22 = sadd.s32 1, %s18
    $region7: #{tpu_custom_call.1} parent=1 // loop_footer_branch
      %17 = sbr.rel target = $region3
    $region8: #{tpu_custom_call.1} parent=1 // loop_exit
      _
    %317 = vsyncpa [#allocation3], 1
    %s318 = scalar_lea.sflag [#allocation3], 1
    %319 = vsyncpa %s318, 1
    %320 = vsyncpa [#allocation6], 1
    %s321 = scalar_lea.sflag [#allocation6], 1
    %322 = vsyncpa %s321, 1
    %323 = vsyncpa [#allocation4], 1
    %s324 = scalar_lea.sflag [#allocation4], 1
    %325 = vsyncpa %s324, 1

</llo_original>
